<compile_context>
chip_gen: v6e
topology: v6e:2x2x1
jax: 0.10.0
libtpu: 0.0.40
codegen_flags: <defaults>
</compile_context>

<pallas_src>
import functools

import jax
import jax.numpy as jnp
from jax import lax
from jax.experimental import pallas as pl
from jax.experimental.pallas import tpu as pltpu

_C_CHUNK = 512  # lanes per class-dim chunk inside the kernel (multiple of 128)


def _label_smooth_kernel(inp_ref, tgt_ref, out_ref, *, smoothing: float,
                         total_rows: int):
    g = pl.program_id(0)              # row-group ("parallel" axis)
    k = pl.program_id(1)              # row-block within group ("arbitrary")
    nk = pl.num_programs(1)

    # Output block (1, tm, 1) is resident across the inner axis: init once.
    @pl.when(k == 0)
    def _():
        out_ref[...] = jnp.zeros_like(out_ref)

    tm, C = inp_ref.shape
    tgt = tgt_ref[...]                            # (tm, 1) int32

    def chunk_update(carry, xc, col0, width):
        # One fused pass over a (tm, width) chunk of logits: update running
        # max, rescaled exp-sum, plain sum and masked target-column sum.
        m, l, ssum, stgt = carry
        xc = xc.astype(jnp.float32)                               # chunk-sized upcast
        cmax = jnp.max(xc, axis=-1, keepdims=True)
        m_new = jnp.maximum(m, cmax)
        l = l * jnp.exp(m - m_new) + jnp.sum(jnp.exp(xc - m_new),
                                             axis=-1, keepdims=True)
        ssum = ssum + jnp.sum(xc, axis=-1, keepdims=True)
        # Lane iota (1, width) broadcast-compared against (tm, 1) targets:
        # no (tm, C) int32 temporary.
        col = col0 + lax.broadcasted_iota(jnp.int32, (1, width), 1)
        stgt = stgt + jnp.sum(jnp.where(col == tgt, xc, 0.0),
                              axis=-1, keepdims=True)
        return m_new, l, ssum, stgt

    zeros = jnp.zeros((tm, 1), jnp.float32)
    carry = (jnp.full((tm, 1), -1e30, jnp.float32), zeros, zeros, zeros)

    n_full = C // _C_CHUNK
    rem = C - n_full * _C_CHUNK

    if n_full > 0:
        def body(c, carry):
            off = pl.multiple_of(c * _C_CHUNK, 128)
            xc = inp_ref[:, pl.ds(off, _C_CHUNK)]
            return chunk_update(carry, xc, c * _C_CHUNK, _C_CHUNK)
        carry = lax.fori_loop(0, n_full, body, carry)

    if rem > 0:                                    # static tail chunk
        xc = inp_ref[:, pl.ds(n_full * _C_CHUNK, rem)]
        carry = chunk_update(carry, xc, n_full * _C_CHUNK, rem)

    m, l, ssum, stgt = carry
    lse = m + jnp.log(l)                           # (tm, 1) row logsumexp

    on_val = jnp.float32(1.0 - smoothing)
    off_val = jnp.float32(smoothing / (C - 1.0)) if C > 1 else jnp.float32(0.0)

    logp_tgt = stgt - lse                          # log_prob at target
    # TODO(synk): for huge C / extreme logits this closed form can lose a few
    # f32 bits to cancellation; an extra (x - lse) sweep would fix it.
    logp_sum = ssum - jnp.float32(C) * lse         # sum_c log_prob
    per_row = -((on_val - off_val) * logp_tgt + off_val * logp_sum)  # (tm, 1)

    # Mask rows that are padding (global row id >= true N).
    row0 = (g * nk + k) * tm
    rid = row0 + lax.broadcasted_iota(jnp.int32, (tm, 1), 0)
    per_row = jnp.where(rid < total_rows, per_row, jnp.float32(0.0))

    # TODO(synk): lane-sparse accumulator; a (1, 8, 128) lane-dense partial
    # would shave a few VPU ops per step (negligible HBM cost either way).
    out_ref[...] += per_row[None, :, :]


def _num_tensorcores():
    """Best-effort TensorCore count per chip (2 on v7x, 1 on v5e/v6e)."""
    try:
        info = pltpu.get_tpu_info()
        for attr in ("num_cores", "core_count", "num_tensorcores",
                     "tensorcore_count", "cores_per_chip"):
            v = getattr(info, attr, None)
            if isinstance(v, int) and 1 <= v <= 8:
                return v
    except Exception:
        pass
    try:
        kind = jax.devices()[0].device_kind.lower()
        if "v7" in kind or "7x" in kind:
            return 2
    except Exception:
        pass
    return 1


def label_smooth_loss(inp, target, *, smoothing=0.0, tile_rows=None,
                      num_groups=None, vmem_limit_bytes=None):
    """inp: (N, C) float (f32 or bf16); target: (N,) int. Returns scalar f32."""
    N, C = inp.shape
    itemsize = jnp.dtype(inp.dtype).itemsize

    # Generation-aware scoped-VMEM budget (<= 3/4 of physical, <= ~100 MiB).
    if vmem_limit_bytes is None:
        try:
            cap = pltpu.get_tpu_info().vmem_capacity_bytes
        except Exception:
            cap = 64 * 1024 * 1024
        vmem_limit_bytes = min(int(cap * 3 // 4), 100 * 1024 * 1024)

    ch = min(C, _C_CHUNK)
    if tile_rows is None:
        # Per-row resident bytes:
        #   2x double-buffered input block
        # + ~4 chunk-sized f32 temporaries (upcast / exp / mask / where)
        # + ~6 lane-sparse (tm, 1) row vectors (carries, per_row, mask), each
        #   padded to a full 128-lane tile in VMEM (~512 B/row f32).
        per_row_bytes = 2 * C * itemsize + 4 * 4 * ch + 6 * 512
        budget = int(vmem_limit_bytes) * 2 // 3
        tile_rows = budget // max(1, per_row_bytes)
        # Aim for multi-MiB streamed blocks; C-dependent cap, bounded at 8192.
        cap_rows = min(8192, max(1024, (8 * 1024 * 1024) // max(1, C * itemsize)))
        tile_rows = min(tile_rows, cap_rows, max(8, ((N + 7) // 8) * 8))
        tile_rows = max(8, (tile_rows // 8) * 8)
    assert tile_rows % 8 == 0

    n_blocks = -(-N // tile_rows)
    if num_groups is None:
        num_groups = _num_tensorcores()            # v7x: 2; v5e/v6e: 1
    G = max(1, min(num_groups, n_blocks))
    K = -(-n_blocks // G)
    N_pad = G * K * tile_rows

    if N_pad != N:
        inp = jnp.pad(inp, ((0, N_pad - N), (0, 0)))
    tgt = target.astype(jnp.int32).reshape(-1)
    if N_pad != N:
        tgt = jnp.pad(tgt, (0, N_pad - N))
    tgt2d = tgt.reshape(N_pad, 1)

    kernel = functools.partial(_label_smooth_kernel,
                               smoothing=float(smoothing), total_rows=N)

    partials = pl.pallas_call(
        kernel,
        out_shape=jax.ShapeDtypeStruct((G, tile_rows, 1), jnp.float32),
        grid_spec=pltpu.PrefetchScalarGridSpec(
            num_scalar_prefetch=0,
            grid=(G, K),
            in_specs=[
                pl.BlockSpec((tile_rows, C), lambda g, k: (g * K + k, 0)),
                pl.BlockSpec((tile_rows, 1), lambda g, k: (g * K + k, 0)),
            ],
            out_specs=pl.BlockSpec((1, tile_rows, 1), lambda g, k: (g, 0, 0)),
        ),
        compiler_params=pltpu.CompilerParams(
            dimension_semantics=("parallel", "arbitrary"),
            vmem_limit_bytes=int(vmem_limit_bytes),
        ),
    )(inp, tgt2d)

    # Tiny finish: sum the per-row / per-group partials and take the mean.
    return jnp.sum(partials) / jnp.float32(N)


def _reference(inp, target, smoothing):
    log_prob = jax.nn.log_softmax(inp.astype(jnp.float32), axis=-1)
    C = inp.shape[-1]
    weight = jnp.full(inp.shape, smoothing / (C - 1.0), dtype=jnp.float32)
    onehot = jax.nn.one_hot(target, C, dtype=jnp.float32)
    weight = weight * (1.0 - onehot) + onehot * (1.0 - smoothing)
    return jnp.mean(jnp.sum(-weight * log_prob, axis=-1))


if __name__ == "__main__":
    key = jax.random.PRNGKey(0)
    k1, k2 = jax.random.split(key)

    smoothing = 0.1

    # 1) Small dense case: batch of 8 samples, 32 classes, f32.
    N, C = 8, 32
    x = jax.random.normal(k1, (N, C), dtype=jnp.float32)
    tgt = jax.random.randint(k2, (N,), 0, C, dtype=jnp.int32)
    loss = jax.block_until_ready(label_smooth_loss(x, tgt, smoothing=smoothing))
    ref = _reference(x, tgt, smoothing)
    assert jnp.allclose(loss, ref, atol=1e-5, rtol=1e-5), (loss, ref)

    # 2) Ragged / multi-block / multi-group path, C not a multiple of 128.
    N2, C2 = 300, 160
    x2 = jax.random.normal(k1, (N2, C2), dtype=jnp.float32)
    t2 = jax.random.randint(k2, (N2,), 0, C2, dtype=jnp.int32)
    loss2 = jax.block_until_ready(
        label_smooth_loss(x2, t2, smoothing=smoothing, tile_rows=64,
                          num_groups=2))
    ref2 = _reference(x2, t2, smoothing)
    assert jnp.allclose(loss2, ref2, atol=1e-5, rtol=1e-5), (loss2, ref2)

    # 3) bf16 input, C > chunk width (exercises the fori_loop + tail chunk).
    N3, C3 = 64, 640
    x3 = jax.random.normal(k1, (N3, C3), dtype=jnp.float32).astype(jnp.bfloat16)
    t3 = jax.random.randint(k2, (N3,), 0, C3, dtype=jnp.int32)
    loss3 = jax.block_until_ready(label_smooth_loss(x3, t3, smoothing=smoothing))
    ref3 = _reference(x3, t3, smoothing)
    assert jnp.allclose(loss3, ref3, atol=1e-3, rtol=1e-3), (loss3, ref3)

    print("KERNEL_OK")
</pallas_src>

<mosaic_0001>
module attributes {stable_mosaic.version = 11 : i64} {
  func.func @_label_smooth_kernel(%arg0: i32, %arg1: i32, %arg2: memref<8x32xf32, #tpu.memory_space<vmem>>, %arg3: memref<8x1xi32, #tpu.memory_space<vmem>>, %arg4: memref<1x8x1xf32, #tpu.memory_space<vmem>>) attributes {dimension_semantics = [#tpu.dimension_semantics<parallel>, #tpu.dimension_semantics<arbitrary>], iteration_bounds = array<i64: 1, 1>, scalar_prefetch = 0 : i64, scratch_operands = 0 : i64, tpu.core_type = #tpu.core_type<tc>, window_params = [{transform_indices = @transform_0, window_bounds = array<i64: 8, 32>}, {transform_indices = @transform_1, window_bounds = array<i64: 8, 1>}, {transform_indices = @transform_2, window_bounds = array<i64: 1, 8, 1>}]} {
    %c0_i32 = arith.constant 0 : i32
    %0 = arith.cmpi eq, %arg1, %c0_i32 : i32
    %1 = arith.extui %0 : i1 to i32
    %c0_i32_0 = arith.constant 0 : i32
    %2 = arith.cmpi ne, %1, %c0_i32_0 : i32
    scf.if %2 {
      %cst_24 = arith.constant 0.000000e+00 : f32
      %61 = vector.broadcast %cst_24 : f32 to vector<1x8x1xf32>
      %c0_25 = arith.constant 0 : index
      %c0_26 = arith.constant 0 : index
      %c0_27 = arith.constant 0 : index
      %62 = vector.load %arg4[%c0_25, %c0_26, %c0_27] : memref<1x8x1xf32, #tpu.memory_space<vmem>>, vector<1x8x1xf32>
      tpu.vector_store %arg4[%c0_25, %c0_26, %c0_27], %61 {strides = array<i32>} : memref<1x8x1xf32, #tpu.memory_space<vmem>>, vector<1x8x1xf32>,
    } else {
    }
    %c0 = arith.constant 0 : index
    %c0_1 = arith.constant 0 : index
    %3 = vector.load %arg3[%c0, %c0_1] : memref<8x1xi32, #tpu.memory_space<vmem>>, vector<8x1xi32>
    %cst = arith.constant 0.000000e+00 : f32
    %4 = vector.broadcast %cst : f32 to vector<8x1xf32>
    %cst_2 = arith.constant -1.000000e+30 : f32
    %5 = vector.broadcast %cst_2 : f32 to vector<8x1xf32>
    %c0_3 = arith.constant 0 : index
    %c0_4 = arith.constant 0 : index
    %6 = vector.load %arg2[%c0_3, %c0_4] : memref<8x32xf32, #tpu.memory_space<vmem>>, vector<8x32xf32>
    %cst_5 = arith.constant dense<0xFF800000> : vector<8xf32>
    %7 = vector.multi_reduction <maximumf>, %6, %cst_5 [1] : vector<8x32xf32> to vector<8xf32>
    %8 = vector.shape_cast %7 : vector<8xf32> to vector<8x1xf32>
    %9 = arith.maximumf %5, %8 : vector<8x1xf32>
    %10 = arith.subf %5, %9 : vector<8x1xf32>
    %11 = math.exp %10 : vector<8x1xf32>
    %12 = arith.mulf %4, %11 : vector<8x1xf32>
    %13 = vector.broadcast %9 : vector<8x1xf32> to vector<8x32xf32>
    %14 = arith.subf %6, %13 : vector<8x32xf32>
    %15 = math.exp %14 : vector<8x32xf32>
    %cst_6 = arith.constant dense<0.000000e+00> : vector<8xf32>
    %16 = vector.multi_reduction <add>, %15, %cst_6 [1] : vector<8x32xf32> to vector<8xf32>
    %17 = vector.shape_cast %16 : vector<8xf32> to vector<8x1xf32>
    %18 = arith.addf %12, %17 : vector<8x1xf32>
    %cst_7 = arith.constant dense<0.000000e+00> : vector<8xf32>
    %19 = vector.multi_reduction <add>, %6, %cst_7 [1] : vector<8x32xf32> to vector<8xf32>
    %20 = vector.shape_cast %19 : vector<8xf32> to vector<8x1xf32>
    %21 = arith.addf %4, %20 : vector<8x1xf32>
    %22 = tpu.iota {dimensions = array<i32: 1>} : vector<1x32xi32>
    %c0_i32_8 = arith.constant 0 : i32
    %23 = vector.broadcast %c0_i32_8 : i32 to vector<1x32xi32>
    %24 = arith.addi %23, %22 : vector<1x32xi32>
    %25 = vector.broadcast %24 : vector<1x32xi32> to vector<8x32xi32>
    %26 = vector.broadcast %3 : vector<8x1xi32> to vector<8x32xi32>
    %27 = arith.cmpi eq, %25, %26 : vector<8x32xi32>
    %cst_9 = arith.constant 0.000000e+00 : f32
    %28 = vector.broadcast %cst_9 : f32 to vector<8x32xf32>
    %29 = arith.select %27, %6, %28 : vector<8x32xi1>, vector<8x32xf32>
    %cst_10 = arith.constant dense<0.000000e+00> : vector<8xf32>
    %30 = vector.multi_reduction <add>, %29, %cst_10 [1] : vector<8x32xf32> to vector<8xf32>
    %31 = vector.shape_cast %30 : vector<8xf32> to vector<8x1xf32>
    %32 = arith.addf %4, %31 : vector<8x1xf32>
    %33 = math.log %18 : vector<8x1xf32>
    %34 = arith.addf %9, %33 : vector<8x1xf32>
    %35 = arith.subf %32, %34 : vector<8x1xf32>
    %cst_11 = arith.constant 3.200000e+01 : f32
    %36 = vector.broadcast %cst_11 : f32 to vector<8x1xf32>
    %37 = arith.mulf %36, %34 : vector<8x1xf32>
    %38 = arith.subf %21, %37 : vector<8x1xf32>
    %cst_12 = arith.constant 0.899999976 : f32
    %cst_13 = arith.constant 0.0032258064 : f32
    %39 = arith.subf %cst_12, %cst_13 : f32
    %40 = vector.broadcast %39 : f32 to vector<8x1xf32>
    %41 = arith.mulf %40, %35 : vector<8x1xf32>
    %cst_14 = arith.constant 0.0032258064 : f32
    %42 = vector.broadcast %cst_14 : f32 to vector<8x1xf32>
    %43 = arith.mulf %42, %38 : vector<8x1xf32>
    %44 = arith.addf %41, %43 : vector<8x1xf32>
    %cst_15 = arith.constant 0.000000e+00 : f32
    %45 = vector.broadcast %cst_15 : f32 to vector<8x1xf32>
    %46 = arith.subf %45, %44 : vector<8x1xf32>
    %c1_i32 = arith.constant 1 : i32
    %47 = arith.muli %arg0, %c1_i32 : i32
    %48 = arith.addi %47, %arg1 : i32
    %c8_i32 = arith.constant 8 : i32
    %49 = arith.muli %48, %c8_i32 : i32
    %50 = tpu.iota {dimensions = array<i32: 0>} : vector<8x1xi32>
    %51 = vector.broadcast %49 : i32 to vector<8x1xi32>
    %52 = arith.addi %51, %50 : vector<8x1xi32>
    %c8_i32_16 = arith.constant 8 : i32
    %53 = vector.broadcast %c8_i32_16 : i32 to vector<8x1xi32>
    %54 = arith.cmpi slt, %52, %53 : vector<8x1xi32>
    %cst_17 = arith.constant 0.000000e+00 : f32
    %55 = vector.broadcast %cst_17 : f32 to vector<8x1xf32>
    %56 = arith.select %54, %46, %55 : vector<8x1xi1>, vector<8x1xf32>
    %c0_18 = arith.constant 0 : index
    %c0_19 = arith.constant 0 : index
    %c0_20 = arith.constant 0 : index
    %57 = vector.load %arg4[%c0_18, %c0_19, %c0_20] : memref<1x8x1xf32, #tpu.memory_space<vmem>>, vector<1x8x1xf32>
    %58 = vector.shape_cast %56 : vector<8x1xf32> to vector<1x8x1xf32>
    %59 = arith.addf %57, %58 : vector<1x8x1xf32>
    %c0_21 = arith.constant 0 : index
    %c0_22 = arith.constant 0 : index
    %c0_23 = arith.constant 0 : index
    %60 = vector.load %arg4[%c0_21, %c0_22, %c0_23] : memref<1x8x1xf32, #tpu.memory_space<vmem>>, vector<1x8x1xf32>
    tpu.vector_store %arg4[%c0_21, %c0_22, %c0_23], %59 {strides = array<i32>} : memref<1x8x1xf32, #tpu.memory_space<vmem>>, vector<1x8x1xf32>,
    return
  }
  func.func @transform_0(%arg0: i32, %arg1: i32) -> (i32, i32) {
    %c1_i32 = arith.constant 1 : i32
    %0 = arith.muli %arg0, %c1_i32 : i32
    %1 = arith.addi %0, %arg1 : i32
    %c0_i32 = arith.constant 0 : i32
    %c0_i32_0 = arith.constant 0 : i32
    return %1, %c0_i32 : i32, i32
  }
  func.func @transform_1(%arg0: i32, %arg1: i32) -> (i32, i32) {
    %c1_i32 = arith.constant 1 : i32
    %0 = arith.muli %arg0, %c1_i32 : i32
    %1 = arith.addi %0, %arg1 : i32
    %c0_i32 = arith.constant 0 : i32
    %c0_i32_0 = arith.constant 0 : i32
    return %1, %c0_i32 : i32, i32
  }
  func.func @transform_2(%arg0: i32, %arg1: i32) -> (i32, i32, i32) {
    %c0_i32 = arith.constant 0 : i32
    %c0_i32_0 = arith.constant 0 : i32
    %c0_i32_1 = arith.constant 0 : i32
    return %arg0, %c0_i32, %c0_i32_0 : i32, i32, i32
  }
}

</mosaic_0001>

<llo_original>
// kernel: tpu_custom_call.1
$region0: #{tpu_custom_call.1}
  #allocation0 [shape = 'u32[]', space=smem, size = 0x4, offset = 0x4, fixed_abs, tag = 'smem constant byte address 0x4 - core index']
  #allocation1 [shape = 'u32[144,128]{1,0:T(1,128)}', space=vmem, size = 0x12000, scoped, tag = 'internal scratch']
  %s0 = inlined_call_operand.vmem [shape: f32[8,32], index: 0, kind: input, shape index: {}]
  %s1 = inlined_call_operand.vmem [shape: s32[8,1], index: 1, kind: input, shape index: {}]
  %s2 = inlined_call_operand.vmem [shape: f32[1,8,1], index: 2, kind: output, shape index: {}]
  %s3 = sld [smem:[#allocation0]]
  $region22: #{tpu_custom_call.1} parent=0
    _
  %s5 = ssub.s32 1, %s3
  %s6 = scalar_select 0, %s5, %s3
  // Predicated region
  $region2: #{tpu_custom_call.1} parent=0 // pred_check
    _
  $region3: #{tpu_custom_call.1} parent=0 // pred_check_branch
    %8 = sbr.rel (0) target = $region5
  $region4: #{tpu_custom_call.1} parent=0 // pred_region
    %s9 = sadd.s32 0, 0
    %p10 = scmp.lt.s32.totalorder %s9, 0
    %s11 = scalar_select %p10, %s9, 0
    %s12 = smul.addr %s11, 8
    %s13 = scalar_lea.vmem %s0, %s12
    %s14 = sadd.s32 0, 0
  $region5: #{tpu_custom_call.1} parent=0 // pred_fallthru
    _
  // Predicated region
  $region6: #{tpu_custom_call.1} parent=0 // pred_check
    _
  $region7: #{tpu_custom_call.1} parent=0 // pred_check_branch
    %16 = sbr.rel (0) target = $region9
  $region8: #{tpu_custom_call.1} parent=0 // pred_region
    %s17 = sadd.s32 0, 0
    %p18 = scmp.lt.s32.totalorder %s17, 0
    %s19 = scalar_select %p18, %s17, 0
    %s20 = smul.addr %s19, 8
    %s21 = scalar_lea.vmem %s1, %s20
    %s22 = sadd.s32 0, 0
  $region9: #{tpu_custom_call.1} parent=0 // pred_fallthru
    _
  %s23 = sadd.s32 0, 0
  %p24 = scmp.lt.s32.totalorder %s23, 0
  %s25 = scalar_select %p24, %s23, 0
  %s26 = smul.addr %s25, 8
  %s27 = scalar_lea.vmem %s0, %s26
  %s28 = sadd.s32 0, 0
  %p29 = scmp.lt.s32.totalorder %s28, 0
  %s30 = scalar_select %p29, %s28, 0
  %s31 = smul.addr %s30, 8
  %s32 = scalar_lea.vmem %s1, %s31
  %s33 = sadd.s32 0, 0
  %p34 = scmp.lt.s32.totalorder %s33, 0
  %s35 = scalar_select %p34, %s33, 0
  %s36 = smul.addr %s35, 8
  %s37 = scalar_lea.vmem %s0, %s36
  %s38 = sadd.s32 0, 0
  %s39 = sadd.s32 0, 0
  %p40 = scmp.lt.s32.totalorder %s39, 0
  %s41 = scalar_select %p40, %s39, 0
  %s42 = smul.addr %s41, 8
  %s43 = scalar_lea.vmem %s1, %s42
  %s44 = sadd.s32 0, 0
  %p45 = scmp.eq.s32.totalorder 0, 0
  // Predicated region
  $region10: #{tpu_custom_call.1} parent=0 // pred_check
    %p46 = pneg %p45
  $region11: #{tpu_custom_call.1} parent=0 // pred_check_branch
    %48 = sbr.rel (%p46) target = $region13
  $region12: #{tpu_custom_call.1} parent=0 // pred_region
    %vm49 = vcmask 7168
    %50 = vst.msk [vmem:[%s2] sm:$0xff] %vm49, 0.0
  $region13: #{tpu_custom_call.1} parent=0 // pred_fallthru
    _
  %v51 = vld [vmem:[%s43] sm:$0xff]
  %v52 = vld [vmem:[%s37] sm:$0xff]
  %vm53 = vcmask 261120
  %v54 = vsel %vm53, %v52, -inf
  %55 = vmax.xlane.f32.xlu0 %v54
  %v56 = vpop.xlane.xlu0 %55
  %v57 = vmax.f32 %v56, -1e+30
  %v58 = vsub.f32 -1e+30, %v57
  %v59 = vmul.f32 %v58, 1.442695
  %v60 = vpow.pop %v59
  %v61 = vmul.f32 %v60, 0.0
  %v62 = vsub.f32 %v52, %v57
  %v63 = vmul.f32 %v62, 1.442695
  %v64 = vpow.pop %v63
  %v65 = vsel %vm53, %v64, 0.0
  %66 = vadd.xlane.f32.xlu0 %v65
  %v67 = vpop.xlane.xlu0 %66
  %v68 = vadd.f32 %v61, %v67
  %v69 = vsel %vm53, %v52, 0.0
  %70 = vadd.xlane.f32.xlu0 %v69
  %v71 = vpop.xlane.xlu0 %70
  %v72 = vadd.f32 %v71, 0.0
  %v73 = vlaneseq
  %v74 = vand.u32 %v73, 127
  %75 = vset.pattern.permute.xlu0 0
  %76 = vperm.xlu0 %75, %v51
  %v77 = vpop.permute.xlu0 %76
  %vm78 = vcmp.eq.s32.totalorder %v74, %v77
  %v79 = vsel %vm78, %v52, 0.0
  %v80 = vsel %vm53, %v79, 0.0
  %81 = vadd.xlane.f32.xlu0 %v80
  %v82 = vpop.xlane.xlu0 %81
  %v83 = vadd.f32 %v82, 0.0
  %v84 = vlog2.pop %v68
  %v85 = vmul.f32 %v84, 0.6931472
  %v86 = vadd.f32 %v57, %v85
  %v87 = vsub.f32 %v83, %v86
  %v88 = vmul.f32 %v86, 32.0
  %v89 = vsub.f32 %v72, %v88
  %v90 = vmul.f32 %v87, 0.8967742
  %v91 = vmul.f32 %v89, 0.0032258064
  %v92 = vadd.f32 %v90, %v91
  %v93 = vsub.f32 0.0, %v92
  %s94 = sadd.s32 0, 0
  %s95 = smul.u32 %s94, 8
  %v96 = vlaneseq
  %v97 = vshrl.u32 %v96, 7
  %v98 = vstv %s95
  %v99 = vadd.s32 %v98, %v97
  %vm100 = vcmp.lt.s32.totalorder %v99, 8
  %v101 = vsel %vm100, %v93, 0.0
  %v102 = vld [vmem:[%s2] sm:$0xff]
  %v103 = vadd.f32 %v102, %v101
  %vm104 = vcmask 7168
  %105 = vst.msk [vmem:[%s2] sm:$0xff] %vm104, %v103
  // Predicated region
  $region14: #{tpu_custom_call.1} parent=0 // pred_check
    _
  $region15: #{tpu_custom_call.1} parent=0 // pred_check_branch
    %107 = sbr.rel (0) target = $region17
  $region16: #{tpu_custom_call.1} parent=0 // pred_region
    _
  $region17: #{tpu_custom_call.1} parent=0 // pred_fallthru
    _
  // Predicated region
  $region18: #{tpu_custom_call.1} parent=0 // pred_check
    _
  $region19: #{tpu_custom_call.1} parent=0 // pred_check_branch
    %109 = sbr.rel (0) target = $region21
  $region20: #{tpu_custom_call.1} parent=0 // pred_region
    _
  $region21: #{tpu_custom_call.1} parent=0 // pred_fallthru
    _

</llo_original>
